<compile_context>
chip_gen: v7x
topology: tpu7x:2x2x1
jax: 0.10.0
libtpu: 0.0.40
codegen_flags: <defaults>
</compile_context>

<pallas_src>
import jax
import jax.numpy as jnp
from jax.experimental import pallas as pl
from jax.experimental.pallas import tpu as pltpu

NF = 32            # nf (feature width)
TILE_N_MAX = 8192  # patch rows (lanes) per grid step


# ---------------------------------------------------------------------------
# Pallas kernel: full MuLUT unit on a tile of patch rows (transposed layout).
#   x_ref   : (4, T)        f32   -- 2x2 patch taps, rows = taps, lanes = patches
#   w1_ref  : (nf, 4)       f32   -- conv_naive weight, transposed (VPU path)
#   w2_ref  : (nf, nf)      bf16  -- conv2 weight, transposed
#   w3_ref  : (nf, 2nf)     bf16  -- conv3 weight, transposed & K-concatenated
#   w4_ref  : (nf, 3nf)     bf16  -- conv4 weight, transposed & K-concatenated
#   w5_ref  : (nf, 4nf)     bf16  -- conv5 weight, transposed & K-concatenated
#   w6c_ref : (nf, 5)       f32   -- conv6 weight, col k = w6[k*nf:(k+1)*nf, 0]
#   b_ref   : (nf, 6)       f32   -- biases b1..b5 in cols 0..4, b6 in col 5
#   o_ref   : (1, T)        f32   -- tanh output (lane-dense)
#   feats_ref: (4nf, T)     bf16  -- VMEM scratch holding f1..f4 (MXU RHS)
# ---------------------------------------------------------------------------
def _mulut_kernel(x_ref, w1_ref, w2_ref, w3_ref, w4_ref, w5_ref,
                  w6c_ref, b_ref, o_ref, feats_ref):
    cdt = jnp.bfloat16
    x = x_ref[...]                       # (4, T)  f32
    w1 = w1_ref[...]                     # (nf, 4) f32
    w6c = w6c_ref[...]                   # (nf, 5) f32
    b = b_ref[...]                       # (nf, 6) f32

    def mm(w_ref, k_rows):
        # bf16 x bf16 -> f32 MXU dot; RHS streamed from the feats scratch.
        return jnp.dot(w_ref[...], feats_ref[0:k_rows, :],
                       preferred_element_type=jnp.float32)

    # conv_naive: Conv(1, nf, 2) on a 2x2 patch.  K=4 contraction on the VPU
    # (4 broadcast multiply-adds) so the MXU is reserved for the big dots.
    f1 = (w1[:, 0:1] * x[0:1, :] + w1[:, 1:2] * x[1:2, :]
          + w1[:, 2:3] * x[2:3, :] + w1[:, 3:4] * x[3:4, :])
    f1 = jnp.maximum(f1 + b[:, 0:1], 0.0)                       # (nf, T) f32
    feats_ref[0:NF, :] = f1.astype(cdt)
    acc = w6c[:, 0:1] * f1                                      # conv6 on VPU

    # DenseConv chain, concat-free but K-concatenated: one dot per stage with
    # contraction depth 32 / 64 / 96 / 128 over the growing feats scratch.
    f2 = jnp.maximum(mm(w2_ref, NF) + b[:, 1:2], 0.0)
    feats_ref[NF:2 * NF, :] = f2.astype(cdt)
    acc += w6c[:, 1:2] * f2

    f3 = jnp.maximum(mm(w3_ref, 2 * NF) + b[:, 2:3], 0.0)
    feats_ref[2 * NF:3 * NF, :] = f3.astype(cdt)
    acc += w6c[:, 2:3] * f3

    f4 = jnp.maximum(mm(w4_ref, 3 * NF) + b[:, 3:4], 0.0)
    feats_ref[3 * NF:4 * NF, :] = f4.astype(cdt)
    acc += w6c[:, 3:4] * f4

    f5 = jnp.maximum(mm(w5_ref, 4 * NF) + b[:, 4:5], 0.0)
    acc += w6c[:, 4:5] * f5                                     # f5 never stored

    # conv6 (5nf -> 1): single cross-sublane (XLU) reduce of the VPU
    # accumulator, + bias + tanh (EUP).  Output is (1, T): lane-dense stores.
    o_ref[...] = jnp.tanh(jnp.sum(acc, axis=0, keepdims=True) + b[0:1, 5:6])


# ---------------------------------------------------------------------------
# Glue: patch extraction (F.unfold K=2, C folded into batch), transposed so
# patch rows land in the lane axis.  (kh, kw) row-major tap order == F.unfold.
# ---------------------------------------------------------------------------
def _extract_patches_t(x):
    B, C, H, W = x.shape
    Ho, Wo = H - 1, W - 1
    p00 = x[:, :, 0:Ho, 0:Wo].reshape(-1)
    p01 = x[:, :, 0:Ho, 1:W].reshape(-1)
    p10 = x[:, :, 1:H, 0:Wo].reshape(-1)
    p11 = x[:, :, 1:H, 1:W].reshape(-1)
    patches_t = jnp.stack([p00, p01, p10, p11], axis=0)   # (4, N)
    return patches_t, (B, C, Ho, Wo)


# ---------------------------------------------------------------------------
# Pack / transpose parameters into the kernel's resident weight slabs.
# ---------------------------------------------------------------------------
def pack_params(params, compute_dtype=jnp.bfloat16):
    (w1, b1), (w2, b2), (w3, b3), (w4, b4), (w5, b5), (w6, b6) = params
    nf = w1.shape[1]

    w1t = w1.T.astype(jnp.float32)            # (nf, 4)   VPU path, keep f32
    w2t = w2.T.astype(compute_dtype)          # (nf, nf)
    w3t = w3.T.astype(compute_dtype)          # (nf, 2nf) K-concatenated
    w4t = w4.T.astype(compute_dtype)          # (nf, 3nf)
    w5t = w5.T.astype(compute_dtype)          # (nf, 4nf)
    # conv6 weight as 5 columns, one per feature block (VPU accumulation path).
    w6c = w6[:, 0].reshape(5, nf).T.astype(jnp.float32)          # (nf, 5)

    bias = jnp.stack([b1[0], b2[0], b3[0], b4[0], b5[0]], axis=1)      # (nf, 5)
    bias = jnp.concatenate(
        [bias, jnp.full((nf, 1), b6[0, 0], jnp.float32)], axis=1)      # (nf, 6)
    return w1t, w2t, w3t, w4t, w5t, w6c, bias.astype(jnp.float32)


# ---------------------------------------------------------------------------
# Forward pass.
# ---------------------------------------------------------------------------
def dnnet_forward(x, params):
    patches_t, (B, C, Ho, Wo) = _extract_patches_t(x)
    N = patches_t.shape[1]

    # Large tile to amortize per-step pipeline overhead, but sized so the grid
    # has >= 2 steps whenever possible (v7x megacore can then shard the
    # "parallel" axis across its 2 TensorCores).
    tile = min(TILE_N_MAX, max(128, pl.cdiv(pl.cdiv(N, 2), 128) * 128))
    n_pad = pl.cdiv(N, tile) * tile
    patches_t = jnp.pad(patches_t, ((0, 0), (0, n_pad - N)))

    w1t, w2t, w3t, w4t, w5t, w6c, bias = pack_params(params)

    def resident(arr):
        # Constant index_map -> weight slab DMA'd once and kept resident.
        return pl.BlockSpec(arr.shape, lambda i: (0, 0))

    out = pl.pallas_call(
        _mulut_kernel,
        out_shape=jax.ShapeDtypeStruct((1, n_pad), jnp.float32),
        grid_spec=pltpu.PrefetchScalarGridSpec(
            num_scalar_prefetch=0,
            grid=(n_pad // tile,),
            in_specs=[
                pl.BlockSpec((4, tile), lambda i: (0, i)),
                resident(w1t),
                resident(w2t),
                resident(w3t),
                resident(w4t),
                resident(w5t),
                resident(w6c),
                resident(bias),
            ],
            out_specs=pl.BlockSpec((1, tile), lambda i: (0, i)),
            scratch_shapes=[pltpu.VMEM((4 * NF, tile), jnp.bfloat16)],
        ),
        compiler_params=pltpu.CompilerParams(
            dimension_semantics=("parallel",),
            vmem_limit_bytes=48 * 1024 * 1024),
    )(patches_t, w1t, w2t, w3t, w4t, w5t, w6c, bias)

    out = out[0, :N]                                   # (N,)
    # squeeze/reshape/permute + F.fold(kernel=1, stride=1) == plain reshape.
    return out.reshape(B, C, Ho, Wo)


# ---------------------------------------------------------------------------
# Deterministic parameter init (kaiming-normal weights, zero biases), f32.
# ---------------------------------------------------------------------------
def init_params(key, nf=NF):
    keys = jax.random.split(key, 6)

    def kaiming(k, fan_in, shape):
        return (jax.random.normal(k, shape, jnp.float32)
                * jnp.sqrt(2.0 / fan_in)).astype(jnp.float32)

    w1 = kaiming(keys[0], 4,        (4, nf));        b1 = jnp.zeros((1, nf), jnp.float32)
    w2 = kaiming(keys[1], nf,       (nf, nf));       b2 = jnp.zeros((1, nf), jnp.float32)
    w3 = kaiming(keys[2], 2 * nf,   (2 * nf, nf));   b3 = jnp.zeros((1, nf), jnp.float32)
    w4 = kaiming(keys[3], 3 * nf,   (3 * nf, nf));   b4 = jnp.zeros((1, nf), jnp.float32)
    w5 = kaiming(keys[4], 4 * nf,   (4 * nf, nf));   b5 = jnp.zeros((1, nf), jnp.float32)
    w6 = kaiming(keys[5], 5 * nf,   (5 * nf, 1));    b6 = jnp.zeros((1, 1), jnp.float32)
    return ((w1, b1), (w2, b2), (w3, b3), (w4, b4), (w5, b5), (w6, b6))


# ---------------------------------------------------------------------------
# Pure-JAX reference (same math, f32 HIGHEST, with the original concat chain).
# ---------------------------------------------------------------------------
def dnnet_reference(x, params):
    patches_t, (B, C, Ho, Wo) = _extract_patches_t(x)
    patches = patches_t.T                                           # (N, 4)
    (w1, b1), (w2, b2), (w3, b3), (w4, b4), (w5, b5), (w6, b6) = params
    hp = jax.lax.Precision.HIGHEST

    feat = jax.nn.relu(jnp.dot(patches, w1, precision=hp) + b1)
    for (w, b) in ((w2, b2), (w3, b3), (w4, b4), (w5, b5)):
        f = jax.nn.relu(jnp.dot(feat, w, precision=hp) + b)
        feat = jnp.concatenate([feat, f], axis=-1)
    out = jnp.tanh(jnp.dot(feat, w6, precision=hp) + b6)[:, 0]
    return out.reshape(B, C, Ho, Wo)


if __name__ == "__main__":
    key = jax.random.PRNGKey(0)
    kx, kp = jax.random.split(key)
    x = jax.random.uniform(kx, (2, 1, 16, 16), dtype=jnp.float32)  # NCHW image
    params = init_params(kp)

    y = jax.block_until_ready(dnnet_forward(x, params))
    y_ref = dnnet_reference(x, params)

    assert y.shape == (2, 1, 15, 15), y.shape
    assert bool(jnp.all(jnp.isfinite(y)))
    assert bool(jnp.allclose(y, y_ref, atol=1e-2, rtol=1e-2))
    print("KERNEL_OK")
</pallas_src>

<mosaic_0001>
module attributes {stable_mosaic.version = 11 : i64} {
  func.func @_mulut_kernel(%arg0: i32, %arg1: memref<4x256xf32, #tpu.memory_space<vmem>>, %arg2: memref<32x4xf32, #tpu.memory_space<vmem>>, %arg3: memref<32x32xbf16, #tpu.memory_space<vmem>>, %arg4: memref<32x64xbf16, #tpu.memory_space<vmem>>, %arg5: memref<32x96xbf16, #tpu.memory_space<vmem>>, %arg6: memref<32x128xbf16, #tpu.memory_space<vmem>>, %arg7: memref<32x5xf32, #tpu.memory_space<vmem>>, %arg8: memref<32x6xf32, #tpu.memory_space<vmem>>, %arg9: memref<1x256xf32, #tpu.memory_space<vmem>>, %arg10: memref<128x256xbf16, #tpu.memory_space<vmem>>) attributes {dimension_semantics = [#tpu.dimension_semantics<parallel>], iteration_bounds = array<i64: 2>, scalar_prefetch = 0 : i64, scratch_operands = 1 : i64, tpu.core_type = #tpu.core_type<tc>, window_params = [{transform_indices = @transform_0, window_bounds = array<i64: 4, 256>}, {pipeline_mode = #tpu.pipeline_mode<synchronous>, transform_indices = @transform_1, window_bounds = array<i64: 32, 4>}, {pipeline_mode = #tpu.pipeline_mode<synchronous>, transform_indices = @transform_2, window_bounds = array<i64: 32, 32>}, {pipeline_mode = #tpu.pipeline_mode<synchronous>, transform_indices = @transform_3, window_bounds = array<i64: 32, 64>}, {pipeline_mode = #tpu.pipeline_mode<synchronous>, transform_indices = @transform_4, window_bounds = array<i64: 32, 96>}, {pipeline_mode = #tpu.pipeline_mode<synchronous>, transform_indices = @transform_5, window_bounds = array<i64: 32, 128>}, {pipeline_mode = #tpu.pipeline_mode<synchronous>, transform_indices = @transform_6, window_bounds = array<i64: 32, 5>}, {pipeline_mode = #tpu.pipeline_mode<synchronous>, transform_indices = @transform_7, window_bounds = array<i64: 32, 6>}, {transform_indices = @transform_8, window_bounds = array<i64: 1, 256>}]} {
    %c0 = arith.constant 0 : index
    %c0_0 = arith.constant 0 : index
    %0 = vector.load %arg1[%c0, %c0_0] : memref<4x256xf32, #tpu.memory_space<vmem>>, vector<4x256xf32>
    %c0_1 = arith.constant 0 : index
    %c0_2 = arith.constant 0 : index
    %1 = vector.load %arg2[%c0_1, %c0_2] : memref<32x4xf32, #tpu.memory_space<vmem>>, vector<32x4xf32>
    %c0_3 = arith.constant 0 : index
    %c0_4 = arith.constant 0 : index
    %2 = vector.load %arg7[%c0_3, %c0_4] : memref<32x5xf32, #tpu.memory_space<vmem>>, vector<32x5xf32>
    %c0_5 = arith.constant 0 : index
    %c0_6 = arith.constant 0 : index
    %3 = vector.load %arg8[%c0_5, %c0_6] : memref<32x6xf32, #tpu.memory_space<vmem>>, vector<32x6xf32>
    %4 = vector.extract_strided_slice %1 {offsets = [0, 0], sizes = [32, 1], strides = [1, 1]} : vector<32x4xf32> to vector<32x1xf32>
    %5 = vector.extract_strided_slice %0 {offsets = [0, 0], sizes = [1, 256], strides = [1, 1]} : vector<4x256xf32> to vector<1x256xf32>
    %6 = vector.broadcast %4 : vector<32x1xf32> to vector<32x256xf32>
    %7 = vector.broadcast %5 : vector<1x256xf32> to vector<32x256xf32>
    %8 = arith.mulf %6, %7 : vector<32x256xf32>
    %9 = vector.extract_strided_slice %1 {offsets = [0, 1], sizes = [32, 1], strides = [1, 1]} : vector<32x4xf32> to vector<32x1xf32>
    %10 = vector.extract_strided_slice %0 {offsets = [1, 0], sizes = [1, 256], strides = [1, 1]} : vector<4x256xf32> to vector<1x256xf32>
    %11 = vector.broadcast %9 : vector<32x1xf32> to vector<32x256xf32>
    %12 = vector.broadcast %10 : vector<1x256xf32> to vector<32x256xf32>
    %13 = arith.mulf %11, %12 : vector<32x256xf32>
    %14 = arith.addf %8, %13 : vector<32x256xf32>
    %15 = vector.extract_strided_slice %1 {offsets = [0, 2], sizes = [32, 1], strides = [1, 1]} : vector<32x4xf32> to vector<32x1xf32>
    %16 = vector.extract_strided_slice %0 {offsets = [2, 0], sizes = [1, 256], strides = [1, 1]} : vector<4x256xf32> to vector<1x256xf32>
    %17 = vector.broadcast %15 : vector<32x1xf32> to vector<32x256xf32>
    %18 = vector.broadcast %16 : vector<1x256xf32> to vector<32x256xf32>
    %19 = arith.mulf %17, %18 : vector<32x256xf32>
    %20 = arith.addf %14, %19 : vector<32x256xf32>
    %21 = vector.extract_strided_slice %1 {offsets = [0, 3], sizes = [32, 1], strides = [1, 1]} : vector<32x4xf32> to vector<32x1xf32>
    %22 = vector.extract_strided_slice %0 {offsets = [3, 0], sizes = [1, 256], strides = [1, 1]} : vector<4x256xf32> to vector<1x256xf32>
    %23 = vector.broadcast %21 : vector<32x1xf32> to vector<32x256xf32>
    %24 = vector.broadcast %22 : vector<1x256xf32> to vector<32x256xf32>
    %25 = arith.mulf %23, %24 : vector<32x256xf32>
    %26 = arith.addf %20, %25 : vector<32x256xf32>
    %27 = vector.extract_strided_slice %3 {offsets = [0, 0], sizes = [32, 1], strides = [1, 1]} : vector<32x6xf32> to vector<32x1xf32>
    %28 = vector.broadcast %27 : vector<32x1xf32> to vector<32x256xf32>
    %29 = arith.addf %26, %28 : vector<32x256xf32>
    %cst = arith.constant 0.000000e+00 : f32
    %30 = vector.broadcast %cst : f32 to vector<32x256xf32>
    %31 = arith.maximumf %29, %30 : vector<32x256xf32>
    %32 = arith.truncf %31 : vector<32x256xf32> to vector<32x256xbf16>
    %c0_7 = arith.constant 0 : index
    %c0_8 = arith.constant 0 : index
    %33 = vector.load %arg10[%c0_7, %c0_8] : memref<128x256xbf16, #tpu.memory_space<vmem>>, vector<32x256xbf16>
    tpu.vector_store %arg10[%c0_7, %c0_8], %32 {strides = array<i32>} : memref<128x256xbf16, #tpu.memory_space<vmem>>, vector<32x256xbf16>,
    %34 = vector.extract_strided_slice %2 {offsets = [0, 0], sizes = [32, 1], strides = [1, 1]} : vector<32x5xf32> to vector<32x1xf32>
    %35 = vector.broadcast %34 : vector<32x1xf32> to vector<32x256xf32>
    %36 = arith.mulf %35, %31 : vector<32x256xf32>
    %c0_9 = arith.constant 0 : index
    %c0_10 = arith.constant 0 : index
    %37 = vector.load %arg3[%c0_9, %c0_10] : memref<32x32xbf16, #tpu.memory_space<vmem>>, vector<32x32xbf16>
    %c0_11 = arith.constant 0 : index
    %c0_12 = arith.constant 0 : index
    %38 = vector.load %arg10[%c0_11, %c0_12] : memref<128x256xbf16, #tpu.memory_space<vmem>>, vector<32x256xbf16>
    %cst_13 = arith.constant dense<0.000000e+00> : vector<32x256xf32>
    %39 = tpu.matmul %37, %38, %cst_13 {dimension_numbers = #tpu.dot_dimension_numbers<[1], [0], [0], [1], [0, 0, 1, 1], [], []>} : vector<32x32xbf16>, vector<32x256xbf16>, vector<32x256xf32> -> vector<32x256xf32>
    %40 = vector.extract_strided_slice %3 {offsets = [0, 1], sizes = [32, 1], strides = [1, 1]} : vector<32x6xf32> to vector<32x1xf32>
    %41 = vector.broadcast %40 : vector<32x1xf32> to vector<32x256xf32>
    %42 = arith.addf %39, %41 : vector<32x256xf32>
    %cst_14 = arith.constant 0.000000e+00 : f32
    %43 = vector.broadcast %cst_14 : f32 to vector<32x256xf32>
    %44 = arith.maximumf %42, %43 : vector<32x256xf32>
    %45 = arith.truncf %44 : vector<32x256xf32> to vector<32x256xbf16>
    %c32 = arith.constant 32 : index
    %c0_15 = arith.constant 0 : index
    %46 = vector.load %arg10[%c32, %c0_15] : memref<128x256xbf16, #tpu.memory_space<vmem>>, vector<32x256xbf16>
    tpu.vector_store %arg10[%c32, %c0_15], %45 {strides = array<i32>} : memref<128x256xbf16, #tpu.memory_space<vmem>>, vector<32x256xbf16>,
    %47 = vector.extract_strided_slice %2 {offsets = [0, 1], sizes = [32, 1], strides = [1, 1]} : vector<32x5xf32> to vector<32x1xf32>
    %48 = vector.broadcast %47 : vector<32x1xf32> to vector<32x256xf32>
    %49 = arith.mulf %48, %44 : vector<32x256xf32>
    %50 = arith.addf %36, %49 : vector<32x256xf32>
    %c0_16 = arith.constant 0 : index
    %c0_17 = arith.constant 0 : index
    %51 = vector.load %arg4[%c0_16, %c0_17] : memref<32x64xbf16, #tpu.memory_space<vmem>>, vector<32x64xbf16>
    %c0_18 = arith.constant 0 : index
    %c0_19 = arith.constant 0 : index
    %52 = vector.load %arg10[%c0_18, %c0_19] : memref<128x256xbf16, #tpu.memory_space<vmem>>, vector<64x256xbf16>
    %cst_20 = arith.constant dense<0.000000e+00> : vector<32x256xf32>
    %53 = tpu.matmul %51, %52, %cst_20 {dimension_numbers = #tpu.dot_dimension_numbers<[1], [0], [0], [1], [0, 0, 1, 1], [], []>} : vector<32x64xbf16>, vector<64x256xbf16>, vector<32x256xf32> -> vector<32x256xf32>
    %54 = vector.extract_strided_slice %3 {offsets = [0, 2], sizes = [32, 1], strides = [1, 1]} : vector<32x6xf32> to vector<32x1xf32>
    %55 = vector.broadcast %54 : vector<32x1xf32> to vector<32x256xf32>
    %56 = arith.addf %53, %55 : vector<32x256xf32>
    %cst_21 = arith.constant 0.000000e+00 : f32
    %57 = vector.broadcast %cst_21 : f32 to vector<32x256xf32>
    %58 = arith.maximumf %56, %57 : vector<32x256xf32>
    %59 = arith.truncf %58 : vector<32x256xf32> to vector<32x256xbf16>
    %c64 = arith.constant 64 : index
    %c0_22 = arith.constant 0 : index
    %60 = vector.load %arg10[%c64, %c0_22] : memref<128x256xbf16, #tpu.memory_space<vmem>>, vector<32x256xbf16>
    tpu.vector_store %arg10[%c64, %c0_22], %59 {strides = array<i32>} : memref<128x256xbf16, #tpu.memory_space<vmem>>, vector<32x256xbf16>,
    %61 = vector.extract_strided_slice %2 {offsets = [0, 2], sizes = [32, 1], strides = [1, 1]} : vector<32x5xf32> to vector<32x1xf32>
    %62 = vector.broadcast %61 : vector<32x1xf32> to vector<32x256xf32>
    %63 = arith.mulf %62, %58 : vector<32x256xf32>
    %64 = arith.addf %50, %63 : vector<32x256xf32>
    %c0_23 = arith.constant 0 : index
    %c0_24 = arith.constant 0 : index
    %65 = vector.load %arg5[%c0_23, %c0_24] : memref<32x96xbf16, #tpu.memory_space<vmem>>, vector<32x96xbf16>
    %c0_25 = arith.constant 0 : index
    %c0_26 = arith.constant 0 : index
    %66 = vector.load %arg10[%c0_25, %c0_26] : memref<128x256xbf16, #tpu.memory_space<vmem>>, vector<96x256xbf16>
    %cst_27 = arith.constant dense<0.000000e+00> : vector<32x256xf32>
    %67 = tpu.matmul %65, %66, %cst_27 {dimension_numbers = #tpu.dot_dimension_numbers<[1], [0], [0], [1], [0, 0, 1, 1], [], []>} : vector<32x96xbf16>, vector<96x256xbf16>, vector<32x256xf32> -> vector<32x256xf32>
    %68 = vector.extract_strided_slice %3 {offsets = [0, 3], sizes = [32, 1], strides = [1, 1]} : vector<32x6xf32> to vector<32x1xf32>
    %69 = vector.broadcast %68 : vector<32x1xf32> to vector<32x256xf32>
    %70 = arith.addf %67, %69 : vector<32x256xf32>
    %cst_28 = arith.constant 0.000000e+00 : f32
    %71 = vector.broadcast %cst_28 : f32 to vector<32x256xf32>
    %72 = arith.maximumf %70, %71 : vector<32x256xf32>
    %73 = arith.truncf %72 : vector<32x256xf32> to vector<32x256xbf16>
    %c96 = arith.constant 96 : index
    %c0_29 = arith.constant 0 : index
    %74 = vector.load %arg10[%c96, %c0_29] : memref<128x256xbf16, #tpu.memory_space<vmem>>, vector<32x256xbf16>
    tpu.vector_store %arg10[%c96, %c0_29], %73 {strides = array<i32>} : memref<128x256xbf16, #tpu.memory_space<vmem>>, vector<32x256xbf16>,
    %75 = vector.extract_strided_slice %2 {offsets = [0, 3], sizes = [32, 1], strides = [1, 1]} : vector<32x5xf32> to vector<32x1xf32>
    %76 = vector.broadcast %75 : vector<32x1xf32> to vector<32x256xf32>
    %77 = arith.mulf %76, %72 : vector<32x256xf32>
    %78 = arith.addf %64, %77 : vector<32x256xf32>
    %c0_30 = arith.constant 0 : index
    %c0_31 = arith.constant 0 : index
    %79 = vector.load %arg6[%c0_30, %c0_31] : memref<32x128xbf16, #tpu.memory_space<vmem>>, vector<32x128xbf16>
    %c0_32 = arith.constant 0 : index
    %c0_33 = arith.constant 0 : index
    %80 = vector.load %arg10[%c0_32, %c0_33] : memref<128x256xbf16, #tpu.memory_space<vmem>>, vector<128x256xbf16>
    %cst_34 = arith.constant dense<0.000000e+00> : vector<32x256xf32>
    %81 = tpu.matmul %79, %80, %cst_34 {dimension_numbers = #tpu.dot_dimension_numbers<[1], [0], [0], [1], [0, 0, 1, 1], [], []>} : vector<32x128xbf16>, vector<128x256xbf16>, vector<32x256xf32> -> vector<32x256xf32>
    %82 = vector.extract_strided_slice %3 {offsets = [0, 4], sizes = [32, 1], strides = [1, 1]} : vector<32x6xf32> to vector<32x1xf32>
    %83 = vector.broadcast %82 : vector<32x1xf32> to vector<32x256xf32>
    %84 = arith.addf %81, %83 : vector<32x256xf32>
    %cst_35 = arith.constant 0.000000e+00 : f32
    %85 = vector.broadcast %cst_35 : f32 to vector<32x256xf32>
    %86 = arith.maximumf %84, %85 : vector<32x256xf32>
    %87 = vector.extract_strided_slice %2 {offsets = [0, 4], sizes = [32, 1], strides = [1, 1]} : vector<32x5xf32> to vector<32x1xf32>
    %88 = vector.broadcast %87 : vector<32x1xf32> to vector<32x256xf32>
    %89 = arith.mulf %88, %86 : vector<32x256xf32>
    %90 = arith.addf %78, %89 : vector<32x256xf32>
    %cst_36 = arith.constant dense<0.000000e+00> : vector<256xf32>
    %91 = vector.multi_reduction <add>, %90, %cst_36 [0] : vector<32x256xf32> to vector<256xf32>
    %92 = vector.shape_cast %91 : vector<256xf32> to vector<1x256xf32>
    %93 = vector.extract_strided_slice %3 {offsets = [0, 5], sizes = [1, 1], strides = [1, 1]} : vector<32x6xf32> to vector<1x1xf32>
    %94 = vector.broadcast %93 : vector<1x1xf32> to vector<1x256xf32>
    %95 = arith.addf %92, %94 : vector<1x256xf32>
    %96 = math.tanh %95 : vector<1x256xf32>
    %c0_37 = arith.constant 0 : index
    %c0_38 = arith.constant 0 : index
    %97 = vector.load %arg9[%c0_37, %c0_38] : memref<1x256xf32, #tpu.memory_space<vmem>>, vector<1x256xf32>
    tpu.vector_store %arg9[%c0_37, %c0_38], %96 {strides = array<i32>} : memref<1x256xf32, #tpu.memory_space<vmem>>, vector<1x256xf32>,
    return
  }
  func.func @transform_0(%arg0: i32) -> (i32, i32) {
    %c0_i32 = arith.constant 0 : i32
    %c0_i32_0 = arith.constant 0 : i32
    return %c0_i32, %arg0 : i32, i32
  }
  func.func @transform_1(%arg0: i32) -> (i32, i32) {
    %c0_i32 = arith.constant 0 : i32
    %c0_i32_0 = arith.constant 0 : i32
    %c0_i32_1 = arith.constant 0 : i32
    return %c0_i32, %c0_i32_0 : i32, i32
  }
  func.func @transform_2(%arg0: i32) -> (i32, i32) {
    %c0_i32 = arith.constant 0 : i32
    %c0_i32_0 = arith.constant 0 : i32
    %c0_i32_1 = arith.constant 0 : i32
    return %c0_i32, %c0_i32_0 : i32, i32
  }
  func.func @transform_3(%arg0: i32) -> (i32, i32) {
    %c0_i32 = arith.constant 0 : i32
    %c0_i32_0 = arith.constant 0 : i32
    %c0_i32_1 = arith.constant 0 : i32
    return %c0_i32, %c0_i32_0 : i32, i32
  }
  func.func @transform_4(%arg0: i32) -> (i32, i32) {
    %c0_i32 = arith.constant 0 : i32
    %c0_i32_0 = arith.constant 0 : i32
    %c0_i32_1 = arith.constant 0 : i32
    return %c0_i32, %c0_i32_0 : i32, i32
  }
  func.func @transform_5(%arg0: i32) -> (i32, i32) {
    %c0_i32 = arith.constant 0 : i32
    %c0_i32_0 = arith.constant 0 : i32
    %c0_i32_1 = arith.constant 0 : i32
    return %c0_i32, %c0_i32_0 : i32, i32
  }
  func.func @transform_6(%arg0: i32) -> (i32, i32) {
    %c0_i32 = arith.constant 0 : i32
    %c0_i32_0 = arith.constant 0 : i32
    %c0_i32_1 = arith.constant 0 : i32
    return %c0_i32, %c0_i32_0 : i32, i32
  }
  func.func @transform_7(%arg0: i32) -> (i32, i32) {
    %c0_i32 = arith.constant 0 : i32
    %c0_i32_0 = arith.constant 0 : i32
    %c0_i32_1 = arith.constant 0 : i32
    return %c0_i32, %c0_i32_0 : i32, i32
  }
  func.func @transform_8(%arg0: i32) -> (i32, i32) {
    %c0_i32 = arith.constant 0 : i32
    %c0_i32_0 = arith.constant 0 : i32
    return %c0_i32, %arg0 : i32, i32
  }
}

</mosaic_0001>

<llo_original>
// kernel: tpu_custom_call.1
$region0: #{tpu_custom_call.1}
  #allocation0 [shape = 'u32[]', space=smem, size = 0x4, offset = 0x4, fixed_abs, tag = 'smem constant byte address 0x4 - core index']
  #allocation1 [shape = 'u32[144,128]{1,0:T(1,128)}', space=vmem, size = 0x12000, scoped, tag = 'internal scratch']
  #allocation2 [shape = 'bf16[128,256]{1,0:T(16,128)(2,1)}', space=vmem, size = 0x10000, scoped, tag = 'scratch operand']
  %s0 = inlined_call_operand.vmem [shape: f32[4,512], index: 0, kind: input, shape index: {}]
  %s1 = inlined_call_operand.vmem [shape: f32[32,4], index: 1, kind: input, shape index: {}]
  %s2 = inlined_call_operand.vmem [shape: bf16[32,32], index: 2, kind: input, shape index: {}]
  %s3 = inlined_call_operand.vmem [shape: bf16[32,64], index: 3, kind: input, shape index: {}]
  %s4 = inlined_call_operand.vmem [shape: bf16[32,96], index: 4, kind: input, shape index: {}]
  %s5 = inlined_call_operand.vmem [shape: bf16[32,128], index: 5, kind: input, shape index: {}]
  %s6 = inlined_call_operand.vmem [shape: f32[32,5], index: 6, kind: input, shape index: {}]
  %s7 = inlined_call_operand.vmem [shape: f32[32,6], index: 7, kind: input, shape index: {}]
  %s8 = inlined_call_operand.hbm [shape: f32[1,512], index: 8, kind: output, shape index: {}]
  %s9 = sld [smem:[#allocation0]]
  $region65: #{tpu_custom_call.1} parent=0
    _
  %s11 = ssub.s32 1, %s9
  %s12 = scalar_select 0, %s11, %s9
  $region1: #{tpu_custom_call.1} parent=0
    #allocation3 [shape = 'u8[2048]{0}', space=vmem, size = 0x800, scoped, tag = 'output window, operand 0']
    #allocation4 [shape = 's32[2]{0}', space=sflag, size = 0x8, scoped, tag = 'scoped memory for tpu_custom_call.1']
    %13 = vsyncpa [#allocation4], 0
    %s14 = scalar_lea.sflag [#allocation4], 1
    %15 = vsyncpa %s14, 0
    loop: start=0, step=1, limit=4
    $region2: #{tpu_custom_call.1} parent=1 // loop_pre_header
      _
    $region3: #{tpu_custom_call.1} parent=1 // loop_header
      %s17 = sphi 0, %s21
      %p18 = scmp.ge.s32.totalorder %s17, 4
      %s27 = sphi 0, %s29
      %s30 = sphi 0, %s27
      %s31 = sphi 0, %s30
      %s47 = sphi 0, %s31
      %s51 = sphi 0, %s51
      %s53 = sphi 0, %s51
      %s54 = sphi 0, %s53
      %s68 = sphi 0, %s54
      %s72 = sphi 0, %s72
      %s74 = sphi 0, %s72
      %s75 = sphi 0, %s74
      %s89 = sphi 0, %s75
      %s93 = sphi 0, %s93
      %s95 = sphi 0, %s93
      %s96 = sphi 0, %s95
      %s110 = sphi 0, %s96
      %s114 = sphi 0, %s114
      %s116 = sphi 0, %s114
      %s117 = sphi 0, %s116
      %s131 = sphi 0, %s117
      %s135 = sphi 0, %s135
      %s137 = sphi 0, %s135
      %s138 = sphi 0, %s137
      %s152 = sphi 0, %s138
      %s156 = sphi 0, %s156
      %s158 = sphi 0, %s156
      %s159 = sphi 0, %s158
      %s173 = sphi 0, %s159
      %s177 = sphi 0, %s177
      %s179 = sphi 0, %s177
      %s180 = sphi 0, %s179
      %s194 = sphi 0, %s180
      %s200 = sphi 0, %s202
      %s203 = sphi 0, %s200
      %s204 = sphi 0, %s203
      %s220 = sphi 0, %s204
    $region4: #{tpu_custom_call.1} parent=1 // loop_header_branch
      %20 = sbr.rel (%p18) target = $region8
    $region5: #{tpu_custom_call.1} parent=1 // loop_body
      %s22 = ssub.s32 %s17, 1
      %s23 = ssub.s32 %s17, 2
      %s24 = sadd.s32 %s17, 1
      %s25 = ssub.s32 %s17, %s24
      %p26 = scmp.eq.s32.totalorder %s25, 0
      %s28 = sadd.s32 %s27, 1
      %s29 = scalar_select %p26, %s27, %s28
      %p32 = pneg %p26
      %p33 = scmp.eq.s32.totalorder %s17, 1
      %p34 = por %p32, %p33
      %p35 = scmp.ne.s32.totalorder %s27, %s30
      %p36 = scmp.eq.s32.totalorder %s17, 0
      %p37 = por %p35, %p36
      %p38 = scmp.ne.s32.totalorder %s27, %s30
      %p39 = scmp.eq.s32.totalorder %s22, 1
      %p40 = por %p38, %p39
      %p41 = scmp.ne.s32.totalorder %s30, %s31
      %p42 = scmp.eq.s32.totalorder %s22, 0
      %p43 = por %p41, %p42
      %p44 = scmp.ne.s32.totalorder %s30, %s31
      %p45 = scmp.eq.s32.totalorder %s23, 1
      %p46 = por %p44, %p45
      %p48 = scmp.ne.s32.totalorder %s31, %s47
      %p49 = scmp.eq.s32.totalorder %s23, 0
      %p50 = por %p48, %p49
      %s52 = sadd.s32 %s51, 1
      %p55 = scmp.eq.s32.totalorder %s17, 1
      %p56 = scmp.ne.s32.totalorder %s51, %s53
      %p57 = scmp.eq.s32.totalorder %s17, 0
      %p58 = por %p56, %p57
      %p59 = scmp.ne.s32.totalorder %s51, %s53
      %p60 = scmp.eq.s32.totalorder %s22, 1
      %p61 = por %p59, %p60
      %p62 = scmp.ne.s32.totalorder %s53, %s54
      %p63 = scmp.eq.s32.totalorder %s22, 0
      %p64 = por %p62, %p63
      %p65 = scmp.ne.s32.totalorder %s53, %s54
      %p66 = scmp.eq.s32.totalorder %s23, 1
      %p67 = por %p65, %p66
      %p69 = scmp.ne.s32.totalorder %s54, %s68
      %p70 = scmp.eq.s32.totalorder %s23, 0
      %p71 = por %p69, %p70
      %s73 = sadd.s32 %s72, 1
      %p76 = scmp.eq.s32.totalorder %s17, 1
      %p77 = scmp.ne.s32.totalorder %s72, %s74
      %p78 = scmp.eq.s32.totalorder %s17, 0
      %p79 = por %p77, %p78
      %p80 = scmp.ne.s32.totalorder %s72, %s74
      %p81 = scmp.eq.s32.totalorder %s22, 1
      %p82 = por %p80, %p81
      %p83 = scmp.ne.s32.totalorder %s74, %s75
      %p84 = scmp.eq.s32.totalorder %s22, 0
      %p85 = por %p83, %p84
      %p86 = scmp.ne.s32.totalorder %s74, %s75
      %p87 = scmp.eq.s32.totalorder %s23, 1
      %p88 = por %p86, %p87
      %p90 = scmp.ne.s32.totalorder %s75, %s89
      %p91 = scmp.eq.s32.totalorder %s23, 0
      %p92 = por %p90, %p91
      %s94 = sadd.s32 %s93, 1
      %p97 = scmp.eq.s32.totalorder %s17, 1
      %p98 = scmp.ne.s32.totalorder %s93, %s95
      %p99 = scmp.eq.s32.totalorder %s17, 0
      %p100 = por %p98, %p99
      %p101 = scmp.ne.s32.totalorder %s93, %s95
      %p102 = scmp.eq.s32.totalorder %s22, 1
      %p103 = por %p101, %p102
      %p104 = scmp.ne.s32.totalorder %s95, %s96
      %p105 = scmp.eq.s32.totalorder %s22, 0
      %p106 = por %p104, %p105
      %p107 = scmp.ne.s32.totalorder %s95, %s96
      %p108 = scmp.eq.s32.totalorder %s23, 1
      %p109 = por %p107, %p108
      %p111 = scmp.ne.s32.totalorder %s96, %s110
      %p112 = scmp.eq.s32.totalorder %s23, 0
      %p113 = por %p111, %p112
      %s115 = sadd.s32 %s114, 1
      %p118 = scmp.eq.s32.totalorder %s17, 1
      %p119 = scmp.ne.s32.totalorder %s114, %s116
      %p120 = scmp.eq.s32.totalorder %s17, 0
      %p121 = por %p119, %p120
      %p122 = scmp.ne.s32.totalorder %s114, %s116
      %p123 = scmp.eq.s32.totalorder %s22, 1
      %p124 = por %p122, %p123
      %p125 = scmp.ne.s32.totalorder %s116, %s117
      %p126 = scmp.eq.s32.totalorder %s22, 0
      %p127 = por %p125, %p126
      %p128 = scmp.ne.s32.totalorder %s116, %s117
      %p129 = scmp.eq.s32.totalorder %s23, 1
      %p130 = por %p128, %p129
      %p132 = scmp.ne.s32.totalorder %s117, %s131
      %p133 = scmp.eq.s32.totalorder %s23, 0
      %p134 = por %p132, %p133
      %s136 = sadd.s32 %s135, 1
      %p139 = scmp.eq.s32.totalorder %s17, 1
      %p140 = scmp.ne.s32.totalorder %s135, %s137
      %p141 = scmp.eq.s32.totalorder %s17, 0
      %p142 = por %p140, %p141
      %p143 = scmp.ne.s32.totalorder %s135, %s137
      %p144 = scmp.eq.s32.totalorder %s22, 1
      %p145 = por %p143, %p144
      %p146 = scmp.ne.s32.totalorder %s137, %s138
      %p147 = scmp.eq.s32.totalorder %s22, 0
      %p148 = por %p146, %p147
      %p149 = scmp.ne.s32.totalorder %s137, %s138
      %p150 = scmp.eq.s32.totalorder %s23, 1
      %p151 = por %p149, %p150
      %p153 = scmp.ne.s32.totalorder %s138, %s152
      %p154 = scmp.eq.s32.totalorder %s23, 0
      %p155 = por %p153, %p154
      %s157 = sadd.s32 %s156, 1
      %p160 = scmp.eq.s32.totalorder %s17, 1
      %p161 = scmp.ne.s32.totalorder %s156, %s158
      %p162 = scmp.eq.s32.totalorder %s17, 0
      %p163 = por %p161, %p162
      %p164 = scmp.ne.s32.totalorder %s156, %s158
      %p165 = scmp.eq.s32.totalorder %s22, 1
      %p166 = por %p164, %p165
      %p167 = scmp.ne.s32.totalorder %s158, %s159
      %p168 = scmp.eq.s32.totalorder %s22, 0
      %p169 = por %p167, %p168
      %p170 = scmp.ne.s32.totalorder %s158, %s159
      %p171 = scmp.eq.s32.totalorder %s23, 1
      %p172 = por %p170, %p171
      %p174 = scmp.ne.s32.totalorder %s159, %s173
      %p175 = scmp.eq.s32.totalorder %s23, 0
      %p176 = por %p174, %p175
      %s178 = sadd.s32 %s177, 1
      %p181 = scmp.eq.s32.totalorder %s17, 1
      %p182 = scmp.ne.s32.totalorder %s177, %s179
      %p183 = scmp.eq.s32.totalorder %s17, 0
      %p184 = por %p182, %p183
      %p185 = scmp.ne.s32.totalorder %s177, %s179
      %p186 = scmp.eq.s32.totalorder %s22, 1
      %p187 = por %p185, %p186
      %p188 = scmp.ne.s32.totalorder %s179, %s180
      %p189 = scmp.eq.s32.totalorder %s22, 0
      %p190 = por %p188, %p189
      %p191 = scmp.ne.s32.totalorder %s179, %s180
      %p192 = scmp.eq.s32.totalorder %s23, 1
      %p193 = por %p191, %p192
      %p195 = scmp.ne.s32.totalorder %s180, %s194
      %p196 = scmp.eq.s32.totalorder %s23, 0
      %p197 = por %p195, %p196
      %s198 = ssub.s32 %s17, %s24
      %p199 = scmp.eq.s32.totalorder %s198, 0
      %s201 = sadd.s32 %s200, 1
      %s202 = scalar_select %p199, %s200, %s201
      %p205 = pneg %p199
      %p206 = scmp.eq.s32.totalorder %s17, 1
      %p207 = por %p205, %p206
      %p208 = scmp.ne.s32.totalorder %s200, %s203
      %p209 = scmp.eq.s32.totalorder %s17, 0
      %p210 = por %p208, %p209
      %p211 = scmp.ne.s32.totalorder %s200, %s203
      %p212 = scmp.eq.s32.totalorder %s22, 1
      %p213 = por %p211, %p212
      %p214 = scmp.ne.s32.totalorder %s203, %s204
      %p215 = scmp.eq.s32.totalorder %s22, 0
      %p216 = por %p214, %p215
      %p217 = scmp.ne.s32.totalorder %s203, %s204
      %p218 = scmp.eq.s32.totalorder %s23, 1
      %p219 = por %p217, %p218
      %p221 = scmp.ne.s32.totalorder %s204, %s220
      %p222 = scmp.eq.s32.totalorder %s23, 0
      %p223 = por %p221, %p222
      %p224 = scmp.le.s32.totalorder 1, %s17
      %p225 = scmp.lt.s32.totalorder %s17, 3
      %p226 = pnand %p224, %p225
      %p227 = pneg %p226
      // Predicated region
      $region9: #{tpu_custom_call.1} parent=5 // pred_check
        _
      $region10: #{tpu_custom_call.1} parent=5 // pred_check_branch
        %229 = sbr.rel (%p226) target = $region12
      $region11: #{tpu_custom_call.1} parent=5 // pred_region
        %s230 = ssub.s32 %s17, 1
        // Predicated region
        $region13: #{tpu_custom_call.1} parent=11 // pred_check
          %p231 = pneg %p64
        $region14: #{tpu_custom_call.1} parent=11 // pred_check_branch
          %233 = sbr.rel (%p231) target = $region16
        $region15: #{tpu_custom_call.1} parent=11 // pred_region
          _
        $region16: #{tpu_custom_call.1} parent=11 // pred_fallthru
          _
        // Predicated region
        $region17: #{tpu_custom_call.1} parent=11 // pred_check
          %p234 = pneg %p85
        $region18: #{tpu_custom_call.1} parent=11 // pred_check_branch
          %236 = sbr.rel (%p234) target = $region20
        $region19: #{tpu_custom_call.1} parent=11 // pred_region
          _
        $region20: #{tpu_custom_call.1} parent=11 // pred_fallthru
          _
        // Predicated region
        $region21: #{tpu_custom_call.1} parent=11 // pred_check
          %p237 = pneg %p106
        $region22: #{tpu_custom_call.1} parent=11 // pred_check_branch
          %239 = sbr.rel (%p237) target = $region24
        $region23: #{tpu_custom_call.1} parent=11 // pred_region
          _
        $region24: #{tpu_custom_call.1} parent=11 // pred_fallthru
          _
        // Predicated region
        $region25: #{tpu_custom_call.1} parent=11 // pred_check
          %p240 = pneg %p127
        $region26: #{tpu_custom_call.1} parent=11 // pred_check_branch
          %242 = sbr.rel (%p240) target = $region28
        $region27: #{tpu_custom_call.1} parent=11 // pred_region
          _
        $region28: #{tpu_custom_call.1} parent=11 // pred_fallthru
          _
        // Predicated region
        $region29: #{tpu_custom_call.1} parent=11 // pred_check
          %p243 = pneg %p148
        $region30: #{tpu_custom_call.1} parent=11 // pred_check_branch
          %245 = sbr.rel (%p243) target = $region32
        $region31: #{tpu_custom_call.1} parent=11 // pred_region
          _
        $region32: #{tpu_custom_call.1} parent=11 // pred_fallthru
          _
        // Predicated region
        $region33: #{tpu_custom_call.1} parent=11 // pred_check
          %p246 = pneg %p169
        $region34: #{tpu_custom_call.1} parent=11 // pred_check_branch
          %248 = sbr.rel (%p246) target = $region36
        $region35: #{tpu_custom_call.1} parent=11 // pred_region
          _
        $region36: #{tpu_custom_call.1} parent=11 // pred_fallthru
          _
        // Predicated region
        $region37: #{tpu_custom_call.1} parent=11 // pred_check
          %p249 = pneg %p190
        $region38: #{tpu_custom_call.1} parent=11 // pred_check_branch
          %251 = sbr.rel (%p249) target = $region40
        $region39: #{tpu_custom_call.1} parent=11 // pred_region
          _
        $region40: #{tpu_custom_call.1} parent=11 // pred_fallthru
          _
      $region12: #{tpu_custom_call.1} parent=5 // pred_fallthru
        _
      %p252 = scmp.lt.s32.totalorder %s17, 2
      // Predicated region
      $region41: #{tpu_custom_call.1} parent=5 // pred_check
        %p253 = pneg %p252
      $region42: #{tpu_custom_call.1} parent=5 // pred_check_branch
        %255 = sbr.rel (%p253) target = $region44
      $region43: #{tpu_custom_call.1} parent=5 // pred_region
        // Predicated region
        $region45: #{tpu_custom_call.1} parent=43 // pred_check
          %p256 = pneg %p37
        $region46: #{tpu_custom_call.1} parent=43 // pred_check_branch
          %258 = sbr.rel (%p256) target = $region48
        $region47: #{tpu_custom_call.1} parent=43 // pred_region
          %s259 = smul.u32 2, %s17
          %p260 = scmp.lt.s32.totalorder %s259, 3
          %s261 = scalar_select %p260, %s259, 3
          %s262 = smul.addr %s261, 4
          %s263 = scalar_lea.vmem %s0, %s262
          %s264 = smul.u32 2, %s17
        $region48: #{tpu_custom_call.1} parent=43 // pred_fallthru
          _
      $region44: #{tpu_custom_call.1} parent=5 // pred_fallthru
        _
      %p265 = scmp.le.s32.totalorder 1, %s17
      %p266 = scmp.lt.s32.totalorder %s17, 3
      %p267 = pnand %p265, %p266
      %p268 = pneg %p267
      // Predicated region
      $region49: #{tpu_custom_call.1} parent=5 // pred_check
        _
      $region50: #{tpu_custom_call.1} parent=5 // pred_check_branch
        %270 = sbr.rel (%p267) target = $region52
      $region51: #{tpu_custom_call.1} parent=5 // pred_region
        %s271 = ssub.s32 %s17, 1
        %s272 = smul.u32 2, %s22
        %p273 = scmp.lt.s32.totalorder %s272, 3
        %s274 = scalar_select %p273, %s272, 3
        %s275 = smul.addr %s274, 4
        %s276 = scalar_lea.vmem %s0, %s275
        %p277 = pneg %p43
        %p278 = pneg %p40
        %p279 = pneg %p64
        %p280 = pneg %p61
        %p281 = pneg %p85
        %p282 = pneg %p82
        %p283 = pneg %p106
        %p284 = pneg %p103
        %p285 = pneg %p127
        %p286 = pneg %p124
        %p287 = pneg %p148
        %p288 = pneg %p145
        %p289 = pneg %p169
        %p290 = pneg %p166
        %p291 = pneg %p190
        %p292 = pneg %p187
        %p293 = pneg %p216
        %p294 = pneg %p213
        %s295 = sand.u32 %s203, 1
        %s296 = scalar_lea.sflag [#allocation4], %s295
        %s297 = sand.u32 %s203, 1
        %s298 = smul.addr %s297, 2
        %s299 = scalar_lea.vmem [#allocation3], %s298
        %s300 = smul.u32 2, %s22
        %p301 = scmp.lt.s32.totalorder %s300, 3
        %s302 = scalar_select %p301, %s300, 3
        %s303 = smul.addr %s302, 4
        %s304 = scalar_lea.vmem %s0, %s303
        %s305 = smul.u32 2, %s22
        %s306 = smul.u32 2, %s22
        %v308 = vld [vmem:[%s304] sm:$0xff]
        %v309 = vld [vmem:[%s1] sm:$0xff]
        %v310 = vld [vmem:[%s1 + $0x8] sm:$0xff]
        %v311 = vld [vmem:[%s1 + $0x10] sm:$0xff]
        %v312 = vld [vmem:[%s1 + $0x18] sm:$0xff]
        %v313 = vld [vmem:[%s6] sm:$0xff]
        %v314 = vld [vmem:[%s6 + $0x8] sm:$0xff]
        %v315 = vld [vmem:[%s6 + $0x10] sm:$0xff]
        %v316 = vld [vmem:[%s6 + $0x18] sm:$0xff]
        %v317 = vld [vmem:[%s7] sm:$0xff]
        %v318 = vld [vmem:[%s7 + $0x8] sm:$0xff]
        %v319 = vld [vmem:[%s7 + $0x10] sm:$0xff]
        %v320 = vld [vmem:[%s7 + $0x18] sm:$0xff]
        %322 = vset.pattern.permute.xlu0 0
        %323 = vperm.xlu0 %322, %v309
        %v324 = vpop.permute.xlu0 %323
        %327 = vset.pattern.permute.xlu0 0
        %328 = vperm.xlu0 %327, %v310
        %v329 = vpop.permute.xlu0 %328
        %332 = vset.pattern.permute.xlu0 0
        %333 = vperm.xlu0 %332, %v311
        %v334 = vpop.permute.xlu0 %333
        %337 = vset.pattern.permute.xlu0 0
        %338 = vperm.xlu0 %337, %v312
        %v339 = vpop.permute.xlu0 %338
        %v342 = vlaneseq
        %v343 = vshrl.u32 %v342, 7
        %v344 = vsub.s32 0, %v343
        %v345 = vrot.slane %v308, %v344
        %v346 = vlaneseq
        %v347 = vshrl.u32 %v346, 7
        %v348 = vsub.s32 4, %v347
        %v349 = vrot.slane %v308, %v348
        %v352 = vlaneseq
        %v353 = vshrl.u32 %v352, 7
        %v354 = vsub.s32 0, %v353
        %v355 = vrot.slane %v345, %v354
        %v356 = vlaneseq
        %v357 = vshrl.u32 %v356, 7
        %v358 = vsub.s32 0, %v357
        %v359 = vrot.slane %v349, %v358
        %v360 = vmul.f32 %v324, %v355
        %v361 = vmul.f32 %v324, %v359
        %v362 = vmul.f32 %v329, %v355
        %v363 = vmul.f32 %v329, %v359
        %v364 = vmul.f32 %v334, %v355
        %v365 = vmul.f32 %v334, %v359
        %v366 = vmul.f32 %v339, %v355
        %v367 = vmul.f32 %v339, %v359
        %368 = vset.pattern.permute.xlu0 1
        %369 = vperm.xlu0 %368, %v309
        %v370 = vpop.permute.xlu0 %369
        %372 = vset.pattern.permute.xlu0 1
        %373 = vperm.xlu0 %372, %v310
        %v374 = vpop.permute.xlu0 %373
        %376 = vset.pattern.permute.xlu0 1
        %377 = vperm.xlu0 %376, %v311
        %v378 = vpop.permute.xlu0 %377
        %380 = vset.pattern.permute.xlu0 1
        %381 = vperm.xlu0 %380, %v312
        %v382 = vpop.permute.xlu0 %381
        %v384 = vlaneseq
        %v385 = vshrl.u32 %v384, 7
        %v386 = vsub.s32 1, %v385
        %v387 = vrot.slane %v308, %v386
        %v388 = vlaneseq
        %v389 = vshrl.u32 %v388, 7
        %v390 = vsub.s32 5, %v389
        %v391 = vrot.slane %v308, %v390
        %v394 = vlaneseq
        %v395 = vshrl.u32 %v394, 7
        %v396 = vsub.s32 1, %v395
        %v397 = vrot.slane %v387, %v396
        %v398 = vlaneseq
        %v399 = vshrl.u32 %v398, 7
        %v400 = vsub.s32 1, %v399
        %v401 = vrot.slane %v391, %v400
        %v402 = vmul.f32 %v370, %v397
        %v403 = vmul.f32 %v370, %v401
        %v404 = vmul.f32 %v374, %v397
        %v405 = vmul.f32 %v374, %v401
        %v406 = vmul.f32 %v378, %v397
        %v407 = vmul.f32 %v378, %v401
        %v408 = vmul.f32 %v382, %v397
        %v409 = vmul.f32 %v382, %v401
        %v410 = vadd.f32 %v360, %v402
        %v411 = vadd.f32 %v361, %v403
        %v412 = vadd.f32 %v362, %v404
        %v413 = vadd.f32 %v363, %v405
        %v414 = vadd.f32 %v364, %v406
        %v415 = vadd.f32 %v365, %v407
        %v416 = vadd.f32 %v366, %v408
        %v417 = vadd.f32 %v367, %v409
        %418 = vset.pattern.permute.xlu0 2
        %419 = vperm.xlu0 %418, %v309
        %v420 = vpop.permute.xlu0 %419
        %422 = vset.pattern.permute.xlu0 2
        %423 = vperm.xlu0 %422, %v310
        %v424 = vpop.permute.xlu0 %423
        %426 = vset.pattern.permute.xlu0 2
        %427 = vperm.xlu0 %426, %v311
        %v428 = vpop.permute.xlu0 %427
        %430 = vset.pattern.permute.xlu0 2
        %431 = vperm.xlu0 %430, %v312
        %v432 = vpop.permute.xlu0 %431
        %v434 = vlaneseq
        %v435 = vshrl.u32 %v434, 7
        %v436 = vsub.s32 2, %v435
        %v437 = vrot.slane %v308, %v436
        %v438 = vlaneseq
        %v439 = vshrl.u32 %v438, 7
        %v440 = vsub.s32 6, %v439
        %v441 = vrot.slane %v308, %v440
        %v444 = vlaneseq
        %v445 = vshrl.u32 %v444, 7
        %v446 = vsub.s32 2, %v445
        %v447 = vrot.slane %v437, %v446
        %v448 = vlaneseq
        %v449 = vshrl.u32 %v448, 7
        %v450 = vsub.s32 2, %v449
        %v451 = vrot.slane %v441, %v450
        %v452 = vmul.f32 %v420, %v447
        %v453 = vmul.f32 %v420, %v451
        %v454 = vmul.f32 %v424, %v447
        %v455 = vmul.f32 %v424, %v451
        %v456 = vmul.f32 %v428, %v447
        %v457 = vmul.f32 %v428, %v451
        %v458 = vmul.f32 %v432, %v447
        %v459 = vmul.f32 %v432, %v451
        %v460 = vadd.f32 %v410, %v452
        %v461 = vadd.f32 %v411, %v453
        %v462 = vadd.f32 %v412, %v454
        %v463 = vadd.f32 %v413, %v455
        %v464 = vadd.f32 %v414, %v456
        %v465 = vadd.f32 %v415, %v457
        %v466 = vadd.f32 %v416, %v458
        %v467 = vadd.f32 %v417, %v459
        %468 = vset.pattern.permute.xlu0 3
        %469 = vperm.xlu0 %468, %v309
        %v470 = vpop.permute.xlu0 %469
        %472 = vset.pattern.permute.xlu0 3
        %473 = vperm.xlu0 %472, %v310
        %v474 = vpop.permute.xlu0 %473
        %476 = vset.pattern.permute.xlu0 3
        %477 = vperm.xlu0 %476, %v311
        %v478 = vpop.permute.xlu0 %477
        %480 = vset.pattern.permute.xlu0 3
        %481 = vperm.xlu0 %480, %v312
        %v482 = vpop.permute.xlu0 %481
        %v484 = vlaneseq
        %v485 = vshrl.u32 %v484, 7
        %v486 = vsub.s32 3, %v485
        %v487 = vrot.slane %v308, %v486
        %v488 = vlaneseq
        %v489 = vshrl.u32 %v488, 7
        %v490 = vsub.s32 7, %v489
        %v491 = vrot.slane %v308, %v490
        %v494 = vlaneseq
        %v495 = vshrl.u32 %v494, 7
        %v496 = vsub.s32 3, %v495
        %v497 = vrot.slane %v487, %v496
        %v498 = vlaneseq
        %v499 = vshrl.u32 %v498, 7
        %v500 = vsub.s32 3, %v499
        %v501 = vrot.slane %v491, %v500
        %v502 = vmul.f32 %v470, %v497
        %v503 = vmul.f32 %v470, %v501
        %v504 = vmul.f32 %v474, %v497
        %v505 = vmul.f32 %v474, %v501
        %v506 = vmul.f32 %v478, %v497
        %v507 = vmul.f32 %v478, %v501
        %v508 = vmul.f32 %v482, %v497
        %v509 = vmul.f32 %v482, %v501
        %v510 = vadd.f32 %v460, %v502
        %v511 = vadd.f32 %v461, %v503
        %v512 = vadd.f32 %v462, %v504
        %v513 = vadd.f32 %v463, %v505
        %v514 = vadd.f32 %v464, %v506
        %v515 = vadd.f32 %v465, %v507
        %v516 = vadd.f32 %v466, %v508
        %v517 = vadd.f32 %v467, %v509
        %519 = vset.pattern.permute.xlu0 0
        %520 = vperm.xlu0 %519, %v317
        %v521 = vpop.permute.xlu0 %520
        %524 = vset.pattern.permute.xlu0 0
        %525 = vperm.xlu0 %524, %v318
        %v526 = vpop.permute.xlu0 %525
        %529 = vset.pattern.permute.xlu0 0
        %530 = vperm.xlu0 %529, %v319
        %v531 = vpop.permute.xlu0 %530
        %534 = vset.pattern.permute.xlu0 0
        %535 = vperm.xlu0 %534, %v320
        %v536 = vpop.permute.xlu0 %535
        %v538 = vadd.f32 %v510, %v521
        %v539 = vadd.f32 %v511, %v521
        %v540 = vadd.f32 %v512, %v526
        %v541 = vadd.f32 %v513, %v526
        %v542 = vadd.f32 %v514, %v531
        %v543 = vadd.f32 %v515, %v531
        %v544 = vadd.f32 %v516, %v536
        %v545 = vadd.f32 %v517, %v536
        %v546 = vmax.f32 %v538, 0.0
        %v547 = vmax.f32 %v539, 0.0
        %v548 = vmax.f32 %v540, 0.0
        %v549 = vmax.f32 %v541, 0.0
        %v550 = vmax.f32 %v542, 0.0
        %v551 = vmax.f32 %v543, 0.0
        %v552 = vmax.f32 %v544, 0.0
        %v553 = vmax.f32 %v545, 0.0
        %v554 = vpack.c.bf16 %v548, %v546
        %v555 = vpack.c.bf16 %v549, %v547
        %v556 = vpack.c.bf16 %v552, %v550
        %v557 = vpack.c.bf16 %v553, %v551
        %558 = vst [vmem:[#allocation2] sm:$0xff] %v554
        %559 = vst [vmem:[#allocation2 + $0x8] sm:$0xff] %v555
        %560 = vst [vmem:[#allocation2 + $0x10] sm:$0xff] %v556
        %561 = vst [vmem:[#allocation2 + $0x18] sm:$0xff] %v557
        %563 = vset.pattern.permute.xlu0 0
        %564 = vperm.xlu0 %563, %v313
        %v565 = vpop.permute.xlu0 %564
        %568 = vset.pattern.permute.xlu0 0
        %569 = vperm.xlu0 %568, %v314
        %v570 = vpop.permute.xlu0 %569
        %573 = vset.pattern.permute.xlu0 0
        %574 = vperm.xlu0 %573, %v315
        %v575 = vpop.permute.xlu0 %574
        %578 = vset.pattern.permute.xlu0 0
        %579 = vperm.xlu0 %578, %v316
        %v580 = vpop.permute.xlu0 %579
        %v582 = vmul.f32 %v565, %v546
        %v583 = vmul.f32 %v565, %v547
        %v584 = vmul.f32 %v570, %v548
        %v585 = vmul.f32 %v570, %v549
        %v586 = vmul.f32 %v575, %v550
        %v587 = vmul.f32 %v575, %v551
        %v588 = vmul.f32 %v580, %v552
        %v589 = vmul.f32 %v580, %v553
        %v590 = vld [vmem:[%s2] sm:$0xf]
        %v591 = vld [vmem:[%s2 + $0x4] sm:$0xf]
        %v592 = vld [vmem:[%s2 + $0x8] sm:$0xf]
        %v593 = vld [vmem:[%s2 + $0xc] sm:$0xf]
        %v594 = vld [vmem:[#allocation2] sm:$0xff]
        %v595 = vld [vmem:[#allocation2 + $0x8] sm:$0xff]
        %v596 = vld [vmem:[#allocation2 + $0x10] sm:$0xff]
        %v597 = vld [vmem:[#allocation2 + $0x18] sm:$0xff]
        %598 = vset.pattern.permute.xlu0 1
        %599 = vperm.xlu0 %598, %v317
        %v600 = vpop.permute.xlu0 %599
        %602 = vset.pattern.permute.xlu0 1
        %603 = vperm.xlu0 %602, %v318
        %v604 = vpop.permute.xlu0 %603
        %606 = vset.pattern.permute.xlu0 1
        %607 = vperm.xlu0 %606, %v319
        %v608 = vpop.permute.xlu0 %607
        %610 = vset.pattern.permute.xlu0 1
        %611 = vperm.xlu0 %610, %v320
        %v612 = vpop.permute.xlu0 %611
        %v618 = vunpack.c.l.b16 %v590
        %v619 = vunpack.c.l.b16 %v591
        %v620 = vunpack.c.l.b16 %v592
        %v621 = vunpack.c.l.b16 %v593
        %v622 = vpack.c.b16 %v619, %v618
        %v623 = vpack.c.b16 %v621, %v620
        %vm624 = vcmask 261120
        %v626 = vsel %vm624, %v622, 0
        %v629 = vsel %vm624, %v623, 0
        %631 = vmatprep.subr.bf16.mxu0 %v595
        %632 = vmatpush1.bf16.msra.mxu0 %v594
        %633 = vmatprep.subr.bf16.mxu0 %v597
        %634 = vmatpush1.bf16.msra.mxu0 %v596
        %635 = vmatprep.subr.bf16.mxu0 0
        %636 = vmatpush1.bf16.msra.mxu0 0
        %637 = vmatprep.subr.bf16.mxu0 0
        %638 = vmatpush1.bf16.msra.mxu0 0
        %639 = vmatprep.subr.bf16.mxu0 0
        %640 = vmatpush1.bf16.msra.mxu0 0
        %641 = vmatprep.subr.bf16.mxu0 0
        %642 = vmatpush1.bf16.msra.mxu0 0
        %643 = vmatprep.subr.bf16.mxu0 0
        %644 = vmatpush1.bf16.msra.mxu0 0
        %645 = vmatprep.subr.bf16.mxu0 0
        %646 = vmatpush1.bf16.msra.mxu0 0
        %647 = vmatprep.subr.bf16.mxu0 0
        %648 = vmatpush1.bf16.msra.mxu0 0
        %649 = vmatprep.subr.bf16.mxu0 0
        %650 = vmatpush1.bf16.msra.mxu0 0
        %651 = vmatprep.subr.bf16.mxu0 0
        %652 = vmatpush1.bf16.msra.mxu0 0
        %653 = vmatprep.subr.bf16.mxu0 0
        %654 = vmatpush1.bf16.msra.mxu0 0
        %655 = vmatprep.subr.bf16.mxu0 0
        %656 = vmatpush1.bf16.msra.mxu0 0
        %657 = vmatprep.subr.bf16.mxu0 0
        %658 = vmatpush1.bf16.msra.mxu0 0
        %659 = vmatprep.subr.bf16.mxu0 0
        %660 = vmatpush1.bf16.msra.mxu0 0
        %661 = vmatprep.subr.bf16.mxu0 0
        %662 = vmatpush1.bf16.msra.mxu0 0
        %663 = vmatprep.mubr.bf16.mxu0 0
        %664 = vmatmul.mubr.bf16.gmra.mrb[0].mxu0 %v626
        %v665 = vpop.f32.mrb[0].mxu0
        %v666 = vadd.f32 %v600, %v665
        %v667 = vpop.f32.mrb[0].mxu0
        %v668 = vadd.f32 %v600, %v667
        %v669 = vpop.f32.mrb[0].mxu0
        %v670 = vadd.f32 %v604, %v669
        %v671 = vpop.f32.mrb[0].mxu0
        %v672 = vadd.f32 %v604, %v671
        %673 = vmatprep.mubr.bf16.mxu0 0
        %674 = vmatmul.mubr.bf16.gmra.mrb[0].mxu0 %v629
        %v675 = vpop.f32.mrb[0].mxu0
        %v676 = vadd.f32 %v608, %v675
        %v677 = vpop.f32.mrb[0].mxu0
        %v678 = vadd.f32 %v608, %v677
        %v679 = vpop.f32.mrb[0].mxu0
        %v680 = vadd.f32 %v612, %v679
        %v681 = vpop.f32.mrb[0].mxu0
        %v682 = vadd.f32 %v612, %v681
        %683 = vdwg.mxu0
        %v684 = vmax.f32 %v666, 0.0
        %v685 = vmax.f32 %v668, 0.0
        %v686 = vmax.f32 %v670, 0.0
        %v687 = vmax.f32 %v672, 0.0
        %v688 = vmax.f32 %v676, 0.0
        %v689 = vmax.f32 %v678, 0.0
        %v690 = vmax.f32 %v680, 0.0
        %v691 = vmax.f32 %v682, 0.0
        %v692 = vpack.c.bf16 %v686, %v684
        %v693 = vpack.c.bf16 %v687, %v685
        %v694 = vpack.c.bf16 %v690, %v688
        %v695 = vpack.c.bf16 %v691, %v689
        %696 = vst [vmem:[#allocation2 + $0x20] sm:$0xff] %v692
        %697 = vst [vmem:[#allocation2 + $0x28] sm:$0xff] %v693
        %698 = vst [vmem:[#allocation2 + $0x30] sm:$0xff] %v694
        %699 = vst [vmem:[#allocation2 + $0x38] sm:$0xff] %v695
        %700 = vset.pattern.permute.xlu0 1
        %701 = vperm.xlu0 %700, %v313
        %v702 = vpop.permute.xlu0 %701
        %704 = vset.pattern.permute.xlu0 1
        %705 = vperm.xlu0 %704, %v314
        %v706 = vpop.permute.xlu0 %705
        %708 = vset.pattern.permute.xlu0 1
        %709 = vperm.xlu0 %708, %v315
        %v710 = vpop.permute.xlu0 %709
        %712 = vset.pattern.permute.xlu0 1
        %713 = vperm.xlu0 %712, %v316
        %v714 = vpop.permute.xlu0 %713
        %v716 = vmul.f32 %v702, %v684
        %v717 = vmul.f32 %v702, %v685
        %v718 = vmul.f32 %v706, %v686
        %v719 = vmul.f32 %v706, %v687
        %v720 = vmul.f32 %v710, %v688
        %v721 = vmul.f32 %v710, %v689
        %v722 = vmul.f32 %v714, %v690
        %v723 = vmul.f32 %v714, %v691
        %v724 = vadd.f32 %v582, %v716
        %v725 = vadd.f32 %v583, %v717
        %v726 = vadd.f32 %v584, %v718
        %v727 = vadd.f32 %v585, %v719
        %v728 = vadd.f32 %v586, %v720
        %v729 = vadd.f32 %v587, %v721
        %v730 = vadd.f32 %v588, %v722
        %v731 = vadd.f32 %v589, %v723
        %v732 = vld [vmem:[%s3] sm:$0xf]
        %v733 = vld [vmem:[%s3 + $0x4] sm:$0xf]
        %v734 = vld [vmem:[%s3 + $0x8] sm:$0xf]
        %v735 = vld [vmem:[%s3 + $0xc] sm:$0xf]
        %v736 = vld [vmem:[#allocation2] sm:$0xff]
        %v737 = vld [vmem:[#allocation2 + $0x8] sm:$0xff]
        %v738 = vld [vmem:[#allocation2 + $0x10] sm:$0xff]
        %v739 = vld [vmem:[#allocation2 + $0x18] sm:$0xff]
        %v740 = vld [vmem:[#allocation2 + $0x20] sm:$0xff]
        %v741 = vld [vmem:[#allocation2 + $0x28] sm:$0xff]
        %v742 = vld [vmem:[#allocation2 + $0x30] sm:$0xff]
        %v743 = vld [vmem:[#allocation2 + $0x38] sm:$0xff]
        %744 = vset.pattern.permute.xlu0 2
        %745 = vperm.xlu0 %744, %v317
        %v746 = vpop.permute.xlu0 %745
        %748 = vset.pattern.permute.xlu0 2
        %749 = vperm.xlu0 %748, %v318
        %v750 = vpop.permute.xlu0 %749
        %752 = vset.pattern.permute.xlu0 2
        %753 = vperm.xlu0 %752, %v319
        %v754 = vpop.permute.xlu0 %753
        %756 = vset.pattern.permute.xlu0 2
        %757 = vperm.xlu0 %756, %v320
        %v758 = vpop.permute.xlu0 %757
        %v764 = vunpack.c.l.b16 %v732
        %v765 = vunpack.c.l.b16 %v733
        %v766 = vunpack.c.l.b16 %v734
        %v767 = vunpack.c.l.b16 %v735
        %v768 = vpack.c.b16 %v765, %v764
        %v769 = vpack.c.b16 %v767, %v766
        %vm770 = vcmask 523264
        %v772 = vsel %vm770, %v768, 0
        %v775 = vsel %vm770, %v769, 0
        %777 = vmatprep.subr.bf16.mxu0 %v737
        %778 = vmatpush1.bf16.msra.mxu0 %v736
        %779 = vmatprep.subr.bf16.mxu0 %v739
        %780 = vmatpush1.bf16.msra.mxu0 %v738
        %781 = vmatprep.subr.bf16.mxu0 %v741
        %782 = vmatpush1.bf16.msra.mxu0 %v740
        %783 = vmatprep.subr.bf16.mxu0 %v743
        %784 = vmatpush1.bf16.msra.mxu0 %v742
        %785 = vmatprep.subr.bf16.mxu0 0
        %786 = vmatpush1.bf16.msra.mxu0 0
        %787 = vmatprep.subr.bf16.mxu0 0
        %788 = vmatpush1.bf16.msra.mxu0 0
        %789 = vmatprep.subr.bf16.mxu0 0
        %790 = vmatpush1.bf16.msra.mxu0 0
        %791 = vmatprep.subr.bf16.mxu0 0
        %792 = vmatpush1.bf16.msra.mxu0 0
        %793 = vmatprep.subr.bf16.mxu0 0
        %794 = vmatpush1.bf16.msra.mxu0 0
        %795 = vmatprep.subr.bf16.mxu0 0
        %796 = vmatpush1.bf16.msra.mxu0 0
        %797 = vmatprep.subr.bf16.mxu0 0
        %798 = vmatpush1.bf16.msra.mxu0 0
        %799 = vmatprep.subr.bf16.mxu0 0
        %800 = vmatpush1.bf16.msra.mxu0 0
        %801 = vmatprep.subr.bf16.mxu0 0
        %802 = vmatpush1.bf16.msra.mxu0 0
        %803 = vmatprep.subr.bf16.mxu0 0
        %804 = vmatpush1.bf16.msra.mxu0 0
        %805 = vmatprep.subr.bf16.mxu0 0
        %806 = vmatpush1.bf16.msra.mxu0 0
        %807 = vmatprep.subr.bf16.mxu0 0
        %808 = vmatpush1.bf16.msra.mxu0 0
        %809 = vmatprep.mubr.bf16.mxu0 0
        %810 = vmatmul.mubr.bf16.gmra.mrb[0].mxu0 %v772
        %v811 = vpop.f32.mrb[0].mxu0
        %v812 = vadd.f32 %v746, %v811
        %v813 = vpop.f32.mrb[0].mxu0
        %v814 = vadd.f32 %v746, %v813
        %v815 = vpop.f32.mrb[0].mxu0
        %v816 = vadd.f32 %v750, %v815
        %v817 = vpop.f32.mrb[0].mxu0
        %v818 = vadd.f32 %v750, %v817
        %819 = vmatprep.mubr.bf16.mxu0 0
        %820 = vmatmul.mubr.bf16.gmra.mrb[0].mxu0 %v775
        %v821 = vpop.f32.mrb[0].mxu0
        %v822 = vadd.f32 %v754, %v821
        %v823 = vpop.f32.mrb[0].mxu0
        %v824 = vadd.f32 %v754, %v823
        %v825 = vpop.f32.mrb[0].mxu0
        %v826 = vadd.f32 %v758, %v825
        %v827 = vpop.f32.mrb[0].mxu0
        %v828 = vadd.f32 %v758, %v827
        %829 = vdwg.mxu0
        %v830 = vmax.f32 %v812, 0.0
        %v831 = vmax.f32 %v814, 0.0
        %v832 = vmax.f32 %v816, 0.0
        %v833 = vmax.f32 %v818, 0.0
        %v834 = vmax.f32 %v822, 0.0
        %v835 = vmax.f32 %v824, 0.0
        %v836 = vmax.f32 %v826, 0.0
        %v837 = vmax.f32 %v828, 0.0
        %v838 = vpack.c.bf16 %v832, %v830
        %v839 = vpack.c.bf16 %v833, %v831
        %v840 = vpack.c.bf16 %v836, %v834
        %v841 = vpack.c.bf16 %v837, %v835
        %842 = vst [vmem:[#allocation2 + $0x40] sm:$0xff] %v838
        %843 = vst [vmem:[#allocation2 + $0x48] sm:$0xff] %v839
        %844 = vst [vmem:[#allocation2 + $0x50] sm:$0xff] %v840
        %845 = vst [vmem:[#allocation2 + $0x58] sm:$0xff] %v841
        %846 = vset.pattern.permute.xlu0 2
        %847 = vperm.xlu0 %846, %v313
        %v848 = vpop.permute.xlu0 %847
        %850 = vset.pattern.permute.xlu0 2
        %851 = vperm.xlu0 %850, %v314
        %v852 = vpop.permute.xlu0 %851
        %854 = vset.pattern.permute.xlu0 2
        %855 = vperm.xlu0 %854, %v315
        %v856 = vpop.permute.xlu0 %855
        %858 = vset.pattern.permute.xlu0 2
        %859 = vperm.xlu0 %858, %v316
        %v860 = vpop.permute.xlu0 %859
        %v862 = vmul.f32 %v848, %v830
        %v863 = vmul.f32 %v848, %v831
        %v864 = vmul.f32 %v852, %v832
        %v865 = vmul.f32 %v852, %v833
        %v866 = vmul.f32 %v856, %v834
        %v867 = vmul.f32 %v856, %v835
        %v868 = vmul.f32 %v860, %v836
        %v869 = vmul.f32 %v860, %v837
        %v870 = vadd.f32 %v724, %v862
        %v871 = vadd.f32 %v725, %v863
        %v872 = vadd.f32 %v726, %v864
        %v873 = vadd.f32 %v727, %v865
        %v874 = vadd.f32 %v728, %v866
        %v875 = vadd.f32 %v729, %v867
        %v876 = vadd.f32 %v730, %v868
        %v877 = vadd.f32 %v731, %v869
        %v878 = vld [vmem:[%s4] sm:$0xf]
        %v879 = vld [vmem:[%s4 + $0x4] sm:$0xf]
        %v880 = vld [vmem:[%s4 + $0x8] sm:$0xf]
        %v881 = vld [vmem:[%s4 + $0xc] sm:$0xf]
        %v882 = vld [vmem:[#allocation2] sm:$0xff]
        %v883 = vld [vmem:[#allocation2 + $0x8] sm:$0xff]
        %v884 = vld [vmem:[#allocation2 + $0x10] sm:$0xff]
        %v885 = vld [vmem:[#allocation2 + $0x18] sm:$0xff]
        %v886 = vld [vmem:[#allocation2 + $0x20] sm:$0xff]
        %v887 = vld [vmem:[#allocation2 + $0x28] sm:$0xff]
        %v888 = vld [vmem:[#allocation2 + $0x30] sm:$0xff]
        %v889 = vld [vmem:[#allocation2 + $0x38] sm:$0xff]
        %v890 = vld [vmem:[#allocation2 + $0x40] sm:$0xff]
        %v891 = vld [vmem:[#allocation2 + $0x48] sm:$0xff]
        %v892 = vld [vmem:[#allocation2 + $0x50] sm:$0xff]
        %v893 = vld [vmem:[#allocation2 + $0x58] sm:$0xff]
        %894 = vset.pattern.permute.xlu0 3
        %895 = vperm.xlu0 %894, %v317
        %v896 = vpop.permute.xlu0 %895
        %898 = vset.pattern.permute.xlu0 3
        %899 = vperm.xlu0 %898, %v318
        %v900 = vpop.permute.xlu0 %899
        %902 = vset.pattern.permute.xlu0 3
        %903 = vperm.xlu0 %902, %v319
        %v904 = vpop.permute.xlu0 %903
        %906 = vset.pattern.permute.xlu0 3
        %907 = vperm.xlu0 %906, %v320
        %v908 = vpop.permute.xlu0 %907
        %v914 = vunpack.c.l.b16 %v878
        %v915 = vunpack.c.l.b16 %v879
        %v916 = vunpack.c.l.b16 %v880
        %v917 = vunpack.c.l.b16 %v881
        %v918 = vpack.c.b16 %v915, %v914
        %v919 = vpack.c.b16 %v917, %v916
        %vm920 = vcmask 785408
        %v922 = vsel %vm920, %v918, 0
        %v925 = vsel %vm920, %v919, 0
        %927 = vmatprep.subr.bf16.mxu0 %v883
        %928 = vmatpush1.bf16.msra.mxu0 %v882
        %929 = vmatprep.subr.bf16.mxu0 %v885
        %930 = vmatpush1.bf16.msra.mxu0 %v884
        %931 = vmatprep.subr.bf16.mxu0 %v887
        %932 = vmatpush1.bf16.msra.mxu0 %v886
        %933 = vmatprep.subr.bf16.mxu0 %v889
        %934 = vmatpush1.bf16.msra.mxu0 %v888
        %935 = vmatprep.subr.bf16.mxu0 %v891
        %936 = vmatpush1.bf16.msra.mxu0 %v890
        %937 = vmatprep.subr.bf16.mxu0 %v893
        %938 = vmatpush1.bf16.msra.mxu0 %v892
        %939 = vmatprep.subr.bf16.mxu0 0
        %940 = vmatpush1.bf16.msra.mxu0 0
        %941 = vmatprep.subr.bf16.mxu0 0
        %942 = vmatpush1.bf16.msra.mxu0 0
        %943 = vmatprep.subr.bf16.mxu0 0
        %944 = vmatpush1.bf16.msra.mxu0 0
        %945 = vmatprep.subr.bf16.mxu0 0
        %946 = vmatpush1.bf16.msra.mxu0 0
        %947 = vmatprep.subr.bf16.mxu0 0
        %948 = vmatpush1.bf16.msra.mxu0 0
        %949 = vmatprep.subr.bf16.mxu0 0
        %950 = vmatpush1.bf16.msra.mxu0 0
        %951 = vmatprep.subr.bf16.mxu0 0
        %952 = vmatpush1.bf16.msra.mxu0 0
        %953 = vmatprep.subr.bf16.mxu0 0
        %954 = vmatpush1.bf16.msra.mxu0 0
        %955 = vmatprep.subr.bf16.mxu0 0
        %956 = vmatpush1.bf16.msra.mxu0 0
        %957 = vmatprep.subr.bf16.mxu0 0
        %958 = vmatpush1.bf16.msra.mxu0 0
        %959 = vmatprep.mubr.bf16.mxu0 0
        %960 = vmatmul.mubr.bf16.gmra.mrb[0].mxu0 %v922
        %v961 = vpop.f32.mrb[0].mxu0
        %v962 = vadd.f32 %v896, %v961
        %v963 = vpop.f32.mrb[0].mxu0
        %v964 = vadd.f32 %v896, %v963
        %v965 = vpop.f32.mrb[0].mxu0
        %v966 = vadd.f32 %v900, %v965
        %v967 = vpop.f32.mrb[0].mxu0
        %v968 = vadd.f32 %v900, %v967
        %969 = vmatprep.mubr.bf16.mxu0 0
        %970 = vmatmul.mubr.bf16.gmra.mrb[0].mxu0 %v925
        %v971 = vpop.f32.mrb[0].mxu0
        %v972 = vadd.f32 %v904, %v971
        %v973 = vpop.f32.mrb[0].mxu0
        %v974 = vadd.f32 %v904, %v973
        %v975 = vpop.f32.mrb[0].mxu0
        %v976 = vadd.f32 %v908, %v975
        %v977 = vpop.f32.mrb[0].mxu0
        %v978 = vadd.f32 %v908, %v977
        %979 = vdwg.mxu0
        %v980 = vmax.f32 %v962, 0.0
        %v981 = vmax.f32 %v964, 0.0
        %v982 = vmax.f32 %v966, 0.0
        %v983 = vmax.f32 %v968, 0.0
        %v984 = vmax.f32 %v972, 0.0
        %v985 = vmax.f32 %v974, 0.0
        %v986 = vmax.f32 %v976, 0.0
        %v987 = vmax.f32 %v978, 0.0
        %v988 = vpack.c.bf16 %v982, %v980
        %v989 = vpack.c.bf16 %v983, %v981
        %v990 = vpack.c.bf16 %v986, %v984
        %v991 = vpack.c.bf16 %v987, %v985
        %992 = vst [vmem:[#allocation2 + $0x60] sm:$0xff] %v988
        %993 = vst [vmem:[#allocation2 + $0x68] sm:$0xff] %v989
        %994 = vst [vmem:[#allocation2 + $0x70] sm:$0xff] %v990
        %995 = vst [vmem:[#allocation2 + $0x78] sm:$0xff] %v991
        %996 = vset.pattern.permute.xlu0 3
        %997 = vperm.xlu0 %996, %v313
        %v998 = vpop.permute.xlu0 %997
        %1000 = vset.pattern.permute.xlu0 3
        %1001 = vperm.xlu0 %1000, %v314
        %v1002 = vpop.permute.xlu0 %1001
        %1004 = vset.pattern.permute.xlu0 3
        %1005 = vperm.xlu0 %1004, %v315
        %v1006 = vpop.permute.xlu0 %1005
        %1008 = vset.pattern.permute.xlu0 3
        %1009 = vperm.xlu0 %1008, %v316
        %v1010 = vpop.permute.xlu0 %1009
        %v1012 = vmul.f32 %v998, %v980
        %v1013 = vmul.f32 %v998, %v981
        %v1014 = vmul.f32 %v1002, %v982
        %v1015 = vmul.f32 %v1002, %v983
        %v1016 = vmul.f32 %v1006, %v984
        %v1017 = vmul.f32 %v1006, %v985
        %v1018 = vmul.f32 %v1010, %v986
        %v1019 = vmul.f32 %v1010, %v987
        %v1020 = vadd.f32 %v870, %v1012
        %v1021 = vadd.f32 %v871, %v1013
        %v1022 = vadd.f32 %v872, %v1014
        %v1023 = vadd.f32 %v873, %v1015
        %v1024 = vadd.f32 %v874, %v1016
        %v1025 = vadd.f32 %v875, %v1017
        %v1026 = vadd.f32 %v876, %v1018
        %v1027 = vadd.f32 %v877, %v1019
        %v1028 = vld [vmem:[%s5] sm:$0xf]
        %v1029 = vld [vmem:[%s5 + $0x4] sm:$0xf]
        %v1030 = vld [vmem:[%s5 + $0x8] sm:$0xf]
        %v1031 = vld [vmem:[%s5 + $0xc] sm:$0xf]
        %v1032 = vld [vmem:[#allocation2] sm:$0xff]
        %v1033 = vld [vmem:[#allocation2 + $0x8] sm:$0xff]
        %v1034 = vld [vmem:[#allocation2 + $0x10] sm:$0xff]
        %v1035 = vld [vmem:[#allocation2 + $0x18] sm:$0xff]
        %v1036 = vld [vmem:[#allocation2 + $0x20] sm:$0xff]
        %v1037 = vld [vmem:[#allocation2 + $0x28] sm:$0xff]
        %v1038 = vld [vmem:[#allocation2 + $0x30] sm:$0xff]
        %v1039 = vld [vmem:[#allocation2 + $0x38] sm:$0xff]
        %v1040 = vld [vmem:[#allocation2 + $0x40] sm:$0xff]
        %v1041 = vld [vmem:[#allocation2 + $0x48] sm:$0xff]
        %v1042 = vld [vmem:[#allocation2 + $0x50] sm:$0xff]
        %v1043 = vld [vmem:[#allocation2 + $0x58] sm:$0xff]
        %v1044 = vld [vmem:[#allocation2 + $0x60] sm:$0xff]
        %v1045 = vld [vmem:[#allocation2 + $0x68] sm:$0xff]
        %v1046 = vld [vmem:[#allocation2 + $0x70] sm:$0xff]
        %v1047 = vld [vmem:[#allocation2 + $0x78] sm:$0xff]
        %1048 = vset.pattern.permute.xlu0 4
        %1049 = vperm.xlu0 %1048, %v317
        %v1050 = vpop.permute.xlu0 %1049
        %1052 = vset.pattern.permute.xlu0 4
        %1053 = vperm.xlu0 %1052, %v318
        %v1054 = vpop.permute.xlu0 %1053
        %1056 = vset.pattern.permute.xlu0 4
        %1057 = vperm.xlu0 %1056, %v319
        %v1058 = vpop.permute.xlu0 %1057
        %1060 = vset.pattern.permute.xlu0 4
        %1061 = vperm.xlu0 %1060, %v320
        %v1062 = vpop.permute.xlu0 %1061
        %v1068 = vunpack.c.l.b16 %v1028
        %v1069 = vunpack.c.l.b16 %v1029
        %v1070 = vunpack.c.l.b16 %v1030
        %v1071 = vunpack.c.l.b16 %v1031
        %v1072 = vpack.c.b16 %v1069, %v1068
        %v1073 = vpack.c.b16 %v1071, %v1070
        %1076 = vmatprep.subr.bf16.mxu0 %v1033
        %1077 = vmatpush1.bf16.msra.mxu0 %v1032
        %1078 = vmatprep.subr.bf16.mxu0 %v1035
        %1079 = vmatpush1.bf16.msra.mxu0 %v1034
        %1080 = vmatprep.subr.bf16.mxu0 %v1037
        %1081 = vmatpush1.bf16.msra.mxu0 %v1036
        %1082 = vmatprep.subr.bf16.mxu0 %v1039
        %1083 = vmatpush1.bf16.msra.mxu0 %v1038
        %1084 = vmatprep.subr.bf16.mxu0 %v1041
        %1085 = vmatpush1.bf16.msra.mxu0 %v1040
        %1086 = vmatprep.subr.bf16.mxu0 %v1043
        %1087 = vmatpush1.bf16.msra.mxu0 %v1042
        %1088 = vmatprep.subr.bf16.mxu0 %v1045
        %1089 = vmatpush1.bf16.msra.mxu0 %v1044
        %1090 = vmatprep.subr.bf16.mxu0 %v1047
        %1091 = vmatpush1.bf16.msra.mxu0 %v1046
        %1092 = vmatprep.subr.bf16.mxu0 0
        %1093 = vmatpush1.bf16.msra.mxu0 0
        %1094 = vmatprep.subr.bf16.mxu0 0
        %1095 = vmatpush1.bf16.msra.mxu0 0
        %1096 = vmatprep.subr.bf16.mxu0 0
        %1097 = vmatpush1.bf16.msra.mxu0 0
        %1098 = vmatprep.subr.bf16.mxu0 0
        %1099 = vmatpush1.bf16.msra.mxu0 0
        %1100 = vmatprep.subr.bf16.mxu0 0
        %1101 = vmatpush1.bf16.msra.mxu0 0
        %1102 = vmatprep.subr.bf16.mxu0 0
        %1103 = vmatpush1.bf16.msra.mxu0 0
        %1104 = vmatprep.subr.bf16.mxu0 0
        %1105 = vmatpush1.bf16.msra.mxu0 0
        %1106 = vmatprep.subr.bf16.mxu0 0
        %1107 = vmatpush1.bf16.msra.mxu0 0
        %1108 = vmatprep.mubr.bf16.mxu0 0
        %1109 = vmatmul.mubr.bf16.gmra.mrb[0].mxu0 %v1072
        %v1110 = vpop.f32.mrb[0].mxu0
        %v1111 = vadd.f32 %v1050, %v1110
        %v1112 = vpop.f32.mrb[0].mxu0
        %v1113 = vadd.f32 %v1050, %v1112
        %v1114 = vpop.f32.mrb[0].mxu0
        %v1115 = vadd.f32 %v1054, %v1114
        %v1116 = vpop.f32.mrb[0].mxu0
        %v1117 = vadd.f32 %v1054, %v1116
        %1118 = vmatprep.mubr.bf16.mxu0 0
        %1119 = vmatmul.mubr.bf16.gmra.mrb[0].mxu0 %v1073
        %v1120 = vpop.f32.mrb[0].mxu0
        %v1121 = vadd.f32 %v1058, %v1120
        %v1122 = vpop.f32.mrb[0].mxu0
        %v1123 = vadd.f32 %v1058, %v1122
        %v1124 = vpop.f32.mrb[0].mxu0
        %v1125 = vadd.f32 %v1062, %v1124
        %v1126 = vpop.f32.mrb[0].mxu0
        %v1127 = vadd.f32 %v1062, %v1126
        %1128 = vdwg.mxu0
        %v1129 = vmax.f32 %v1111, 0.0
        %v1130 = vmax.f32 %v1113, 0.0
        %v1131 = vmax.f32 %v1115, 0.0
        %v1132 = vmax.f32 %v1117, 0.0
        %v1133 = vmax.f32 %v1121, 0.0
        %v1134 = vmax.f32 %v1123, 0.0
        %v1135 = vmax.f32 %v1125, 0.0
        %v1136 = vmax.f32 %v1127, 0.0
        %1137 = vset.pattern.permute.xlu0 4
        %1138 = vperm.xlu0 %1137, %v313
        %v1139 = vpop.permute.xlu0 %1138
        %1141 = vset.pattern.permute.xlu0 4
        %1142 = vperm.xlu0 %1141, %v314
        %v1143 = vpop.permute.xlu0 %1142
        %1145 = vset.pattern.permute.xlu0 4
        %1146 = vperm.xlu0 %1145, %v315
        %v1147 = vpop.permute.xlu0 %1146
        %1149 = vset.pattern.permute.xlu0 4
        %1150 = vperm.xlu0 %1149, %v316
        %v1151 = vpop.permute.xlu0 %1150
        %v1153 = vmul.f32 %v1139, %v1129
        %v1154 = vmul.f32 %v1139, %v1130
        %v1155 = vmul.f32 %v1143, %v1131
        %v1156 = vmul.f32 %v1143, %v1132
        %v1157 = vmul.f32 %v1147, %v1133
        %v1158 = vmul.f32 %v1147, %v1134
        %v1159 = vmul.f32 %v1151, %v1135
        %v1160 = vmul.f32 %v1151, %v1136
        %v1161 = vadd.f32 %v1020, %v1153
        %v1162 = vadd.f32 %v1021, %v1154
        %v1163 = vadd.f32 %v1022, %v1155
        %v1164 = vadd.f32 %v1023, %v1156
        %v1165 = vadd.f32 %v1024, %v1157
        %v1166 = vadd.f32 %v1025, %v1158
        %v1167 = vadd.f32 %v1026, %v1159
        %v1168 = vadd.f32 %v1027, %v1160
        %v1169 = vadd.f32 %v1161, %v1163
        %v1170 = vadd.f32 %v1169, %v1165
        %v1171 = vadd.f32 %v1170, %v1167
        %v1172 = vrot.slane %v1171, 4
        %v1173 = vadd.f32 %v1171, %v1172
        %v1174 = vrot.slane %v1173, 2
        %v1175 = vadd.f32 %v1173, %v1174
        %v1176 = vrot.slane %v1175, 1
        %v1177 = vadd.f32 %v1175, %v1176
        %v1178 = vadd.f32 %v1162, %v1164
        %v1179 = vadd.f32 %v1178, %v1166
        %v1180 = vadd.f32 %v1179, %v1168
        %v1181 = vrot.slane %v1180, 4
        %v1182 = vadd.f32 %v1180, %v1181
        %v1183 = vrot.slane %v1182, 2
        %v1184 = vadd.f32 %v1182, %v1183
        %v1185 = vrot.slane %v1184, 1
        %v1186 = vadd.f32 %v1184, %v1185
        %1187 = vset.pattern.permute.xlu0 5
        %1188 = vperm.xlu0 %1187, %v317
        %v1189 = vpop.permute.xlu0 %1188
        %v1191 = vadd.f32 %v1177, %v1189
        %v1192 = vadd.f32 %v1186, %v1189
        %v1193 = vtanh.pop %v1191
        %v1194 = vtanh.pop %v1192
        %v1197 = vcombine.low %v1193, %v1194
        %v1199 = vunpack.c.l.s4 1966171168
        %v1200 = vunpack.c.0.s8 %v1199
        %v1201 = vlaneseq
        %v1202 = vshrl.u32 %v1201, 7
        %v1203 = vsub.s32 %v1200, %v1202
        %v1204 = vrot.slane %v1197, %v1203
        %v1206 = vunpack.c.l.s4 1966171168
        %v1207 = vunpack.c.0.s8 %v1206
        %v1208 = vlaneseq
        %v1209 = vshrl.u32 %v1208, 7
        %v1210 = vsub.s32 %v1207, %v1209
        %v1211 = vrot.slane %v1204, %v1210
        %v1213 = vlaneseq
        %vm1214 = vcmp.ge.s32.totalorder %v1213, 0
        %vm1215 = vcmp.lt.s32.totalorder %v1213, 256
        %vm1216 = vmand %vm1214, %vm1215
        %1217 = vst.msk [vmem:[%s299] sm:$0x3] %vm1216, %v1211
        %s1218 = sand.u32 %s203, 1
        %s1219 = scalar_lea.sflag [#allocation4], %s1218
        %s1220 = sand.u32 %s203, 1
        %s1221 = smul.addr %s1220, 2
        %s1222 = scalar_lea.vmem [#allocation3], %s1221
        // Predicated region
        $region53: #{tpu_custom_call.1} parent=51 // pred_check
          %p1223 = pneg %p213
        $region54: #{tpu_custom_call.1} parent=51 // pred_check_branch
          %1225 = sbr.rel (%p1223) target = $region56
        $region55: #{tpu_custom_call.1} parent=51 // pred_region
          %s1226 = smul.u32 2, %s22
          %s1228 = ssub.s32 32, 32
          %1229 = vsyncadd %s1219, %s1228
          %s1230 = smul.addr %s1226, 16
          %s1231 = scalar_lea.hbm %s8, %s1230
          %s1233 = sshll.u32 %s1222, 4
          %s1234 = int_to_ptr.vmem [resolvable:$true] %s1233
          %1236 = dma.vmem_to_hbm [thread:$0]  %s1234, 32, %s1231, %s1219
        $region56: #{tpu_custom_call.1} parent=51 // pred_fallthru
          _
      $region52: #{tpu_custom_call.1} parent=5 // pred_fallthru
        _
      %p1237 = scmp.le.s32.totalorder 2, %s17
      // Predicated region
      $region57: #{tpu_custom_call.1} parent=5 // pred_check
        %p1238 = pneg %p1237
      $region58: #{tpu_custom_call.1} parent=5 // pred_check_branch
        %1240 = sbr.rel (%p1238) target = $region60
      $region59: #{tpu_custom_call.1} parent=5 // pred_region
        %s1241 = ssub.s32 %s17, 2
        // Predicated region
        $region61: #{tpu_custom_call.1} parent=59 // pred_check
          %p1242 = pneg %p219
        $region62: #{tpu_custom_call.1} parent=59 // pred_check_branch
          %1244 = sbr.rel (%p1242) target = $region64
        $region63: #{tpu_custom_call.1} parent=59 // pred_region
          %s1245 = sand.u32 %s204, 1
          %s1246 = scalar_lea.sflag [#allocation4], %s1245
          %s1247 = sand.u32 %s204, 1
          %s1248 = smul.addr %s1247, 2
          %s1249 = scalar_lea.vmem [#allocation3], %s1248
          %1250 = dma.done %s1246, 32
        $region64: #{tpu_custom_call.1} parent=59 // pred_fallthru
          _
      $region60: #{tpu_custom_call.1} parent=5 // pred_fallthru
        _
    $region6: #{tpu_custom_call.1} parent=1 // loop_footer
      %s21 = sadd.s32 1, %s17
    $region7: #{tpu_custom_call.1} parent=1 // loop_footer_branch
      %16 = sbr.rel target = $region3
    $region8: #{tpu_custom_call.1} parent=1 // loop_exit
      _
    %1251 = vsyncpa [#allocation4], 1
    %s1252 = scalar_lea.sflag [#allocation4], 1
    %1253 = vsyncpa %s1252, 1

</llo_original>
